<compile_context>
chip_gen: v7x
topology: tpu7x:2x2x1
jax: 0.10.0
libtpu: 0.0.40
codegen_flags: <defaults>
</compile_context>

<pallas_src>
import jax
import jax.numpy as jnp
from jax.experimental import pallas as pl
from jax.experimental.pallas import tpu as pltpu

_LANE = 128
_SUBLANE = 16  # bf16 sublane packing


def _round_up(n, m):
    return ((n + m - 1) // m) * m


def _pad2(a, rows, cols):
    r, c = a.shape
    if r == rows and c == cols:
        return a
    return jnp.pad(a, ((0, rows - r), (0, cols - c)))


def _relation_kernel(xy_ref, w1_ref, b1_ref, w2_ref, b2_ref, l_ref, o_ref):
    # xy_ref : (bt, Kp) bf16      w1_ref : (Kp, Hp) bf16   b1_ref : (1, Hp) f32
    # w2_ref : (Hp, Cp) bf16      b2_ref : (1, Cp)  f32    l_ref  : (bt, Cp) f32
    # o_ref  : (bt, 128) f32  (every lane holds the row's result)
    h = jnp.dot(xy_ref[...], w1_ref[...],
                preferred_element_type=jnp.float32)               # (bt, Hp) f32
    h = jnp.maximum(h + b1_ref[...], 0.0)                         # ReLU (f32)
    logits = jnp.dot(h.astype(jnp.bfloat16), w2_ref[...],
                     preferred_element_type=jnp.float32) + b2_ref[...]
    probs = jax.nn.sigmoid(logits)                                # f32
    s = jnp.sum(probs * l_ref[...], axis=1, keepdims=True)        # (bt, 1) f32
    o_ref[...] = jnp.broadcast_to(s, o_ref.shape)                 # lane-dense store


def relation_logits_to_predicate(x, y, l, w1, b1, w2, b2, *, batch_tile=None):
    """x, y: (B, D) f32; l: (B, C); w1: (2D, H); b1: (H,); w2: (H, C); b2: (C,)."""
    B, D = x.shape
    C = l.shape[1]
    H = w1.shape[1]
    K = 2 * D

    Kp = _round_up(K, _LANE)
    Hp = _round_up(H, _LANE)
    Cp = _round_up(C, _LANE)

    if batch_tile is None:
        bt = min(512, _round_up(B, _SUBLANE))
    else:
        bt = batch_tile
    bt = max(_SUBLANE, _round_up(bt, _SUBLANE))
    Bp = _round_up(B, bt)
    grid = (Bp // bt,)

    # Caller-side concat + lane padding; matmul operands cast to bf16.
    xy = jnp.concatenate([x.astype(jnp.float32), y.astype(jnp.float32)], axis=-1)
    xy_p = _pad2(xy, Bp, Kp).astype(jnp.bfloat16)
    l_p = _pad2(l.astype(jnp.float32), Bp, Cp)
    w1_p = _pad2(w1.astype(jnp.float32), Kp, Hp).astype(jnp.bfloat16)
    w2_p = _pad2(w2.astype(jnp.float32), Hp, Cp).astype(jnp.bfloat16)
    b1_p = _pad2(b1.reshape(1, H).astype(jnp.float32), 1, Hp)
    b2_p = _pad2(b2.reshape(1, C).astype(jnp.float32), 1, Cp)

    cost = pl.CostEstimate(
        flops=2 * Bp * (Kp * Hp + Hp * Cp),
        transcendentals=Bp * Cp,
        bytes_accessed=(Bp * Kp * 2 + Kp * Hp * 2 + Hp * Cp * 2
                        + Bp * Cp * 4 + Hp * 4 + Cp * 4 + Bp * _LANE * 4),
    )

    out = pl.pallas_call(
        _relation_kernel,
        out_shape=jax.ShapeDtypeStruct((Bp, _LANE), jnp.float32),
        grid_spec=pltpu.PrefetchScalarGridSpec(
            num_scalar_prefetch=0,
            grid=grid,
            in_specs=[
                pl.BlockSpec((bt, Kp), lambda i: (i, 0)),     # xy (bf16)
                pl.BlockSpec((Kp, Hp), lambda i: (0, 0)),     # w1 (replicated)
                pl.BlockSpec((1, Hp), lambda i: (0, 0)),      # b1
                pl.BlockSpec((Hp, Cp), lambda i: (0, 0)),     # w2 (replicated)
                pl.BlockSpec((1, Cp), lambda i: (0, 0)),      # b2
                pl.BlockSpec((bt, Cp), lambda i: (i, 0)),     # l
            ],
            out_specs=pl.BlockSpec((bt, _LANE), lambda i: (i, 0)),
        ),
        compiler_params=pltpu.CompilerParams(
            dimension_semantics=("parallel",)),
        cost_estimate=cost,
    )(xy_p, w1_p, b1_p, w2_p, b2_p, l_p)

    return out[:B, 0]


def _reference(x, y, l, w1, b1, w2, b2):
    xy = jnp.concatenate([x, y], axis=-1)
    h = jnp.maximum(xy @ w1 + b1, 0.0)
    logits = h @ w2 + b2
    probs = jax.nn.sigmoid(logits)
    return jnp.sum(probs * l, axis=1)


if __name__ == "__main__":
    # TODO(synk): the PyTorch module wraps an arbitrary `logits_model(x, y)`;
    # here it is instantiated as the canonical 2-layer MLP on concat(x, y).
    B, D, H, C = 128, 32, 64, 16

    key = jax.random.PRNGKey(0)
    kx, ky, kl, kw1, kb1, kw2, kb2 = jax.random.split(key, 7)

    x = jax.random.normal(kx, (B, D), dtype=jnp.float32)
    y = jax.random.normal(ky, (B, D), dtype=jnp.float32)
    labels = jax.random.randint(kl, (B,), 0, C)
    l = jax.nn.one_hot(labels, C, dtype=jnp.float32)

    # Parameters stored as (in_features, out_features).
    w1 = jax.random.normal(kw1, (2 * D, H), dtype=jnp.float32) / jnp.sqrt(2.0 * D)
    b1 = jax.random.normal(kb1, (H,), dtype=jnp.float32) * 0.01
    w2 = jax.random.normal(kw2, (H, C), dtype=jnp.float32) / jnp.sqrt(float(H))
    b2 = jax.random.normal(kb2, (C,), dtype=jnp.float32) * 0.01

    out = relation_logits_to_predicate(x, y, l, w1, b1, w2, b2, batch_tile=32)
    out = jax.block_until_ready(out)

    ref = _reference(x, y, l, w1, b1, w2, b2)
    assert out.shape == (B,)
    # bf16 MXU matmuls (f32 accumulation) -> modest tolerance vs f32 reference.
    assert jnp.allclose(out, ref, atol=2e-2, rtol=2e-2), (out, ref)

    print("KERNEL_OK")
</pallas_src>

<mosaic_0001>
module attributes {stable_mosaic.version = 11 : i64} {
  func.func @_relation_kernel(%arg0: i32, %arg1: memref<32x128xbf16, #tpu.memory_space<vmem>>, %arg2: memref<128x128xbf16, #tpu.memory_space<vmem>>, %arg3: memref<1x128xf32, #tpu.memory_space<vmem>>, %arg4: memref<128x128xbf16, #tpu.memory_space<vmem>>, %arg5: memref<1x128xf32, #tpu.memory_space<vmem>>, %arg6: memref<32x128xf32, #tpu.memory_space<vmem>>, %arg7: memref<32x128xf32, #tpu.memory_space<vmem>>) attributes {dimension_semantics = [#tpu.dimension_semantics<parallel>], iteration_bounds = array<i64: 4>, scalar_prefetch = 0 : i64, scratch_operands = 0 : i64, tpu.core_type = #tpu.core_type<tc>, window_params = [{transform_indices = @transform_0, window_bounds = array<i64: 32, 128>}, {pipeline_mode = #tpu.pipeline_mode<synchronous>, transform_indices = @transform_1, window_bounds = array<i64: 128, 128>}, {pipeline_mode = #tpu.pipeline_mode<synchronous>, transform_indices = @transform_2, window_bounds = array<i64: 1, 128>}, {pipeline_mode = #tpu.pipeline_mode<synchronous>, transform_indices = @transform_3, window_bounds = array<i64: 128, 128>}, {pipeline_mode = #tpu.pipeline_mode<synchronous>, transform_indices = @transform_4, window_bounds = array<i64: 1, 128>}, {transform_indices = @transform_5, window_bounds = array<i64: 32, 128>}, {transform_indices = @transform_6, window_bounds = array<i64: 32, 128>}]} {
    %c0 = arith.constant 0 : index
    %c0_0 = arith.constant 0 : index
    %0 = vector.load %arg1[%c0, %c0_0] : memref<32x128xbf16, #tpu.memory_space<vmem>>, vector<32x128xbf16>
    %c0_1 = arith.constant 0 : index
    %c0_2 = arith.constant 0 : index
    %1 = vector.load %arg2[%c0_1, %c0_2] : memref<128x128xbf16, #tpu.memory_space<vmem>>, vector<128x128xbf16>
    %cst = arith.constant dense<0.000000e+00> : vector<32x128xf32>
    %2 = tpu.matmul %0, %1, %cst {dimension_numbers = #tpu.dot_dimension_numbers<[1], [0], [0], [1], [0, 0, 1, 1], [], []>} : vector<32x128xbf16>, vector<128x128xbf16>, vector<32x128xf32> -> vector<32x128xf32>
    %c0_3 = arith.constant 0 : index
    %c0_4 = arith.constant 0 : index
    %3 = vector.load %arg3[%c0_3, %c0_4] : memref<1x128xf32, #tpu.memory_space<vmem>>, vector<1x128xf32>
    %4 = vector.broadcast %3 : vector<1x128xf32> to vector<32x128xf32>
    %5 = arith.addf %2, %4 : vector<32x128xf32>
    %cst_5 = arith.constant 0.000000e+00 : f32
    %6 = vector.broadcast %cst_5 : f32 to vector<32x128xf32>
    %7 = arith.maximumf %5, %6 : vector<32x128xf32>
    %8 = arith.truncf %7 : vector<32x128xf32> to vector<32x128xbf16>
    %c0_6 = arith.constant 0 : index
    %c0_7 = arith.constant 0 : index
    %9 = vector.load %arg4[%c0_6, %c0_7] : memref<128x128xbf16, #tpu.memory_space<vmem>>, vector<128x128xbf16>
    %cst_8 = arith.constant dense<0.000000e+00> : vector<32x128xf32>
    %10 = tpu.matmul %8, %9, %cst_8 {dimension_numbers = #tpu.dot_dimension_numbers<[1], [0], [0], [1], [0, 0, 1, 1], [], []>} : vector<32x128xbf16>, vector<128x128xbf16>, vector<32x128xf32> -> vector<32x128xf32>
    %c0_9 = arith.constant 0 : index
    %c0_10 = arith.constant 0 : index
    %11 = vector.load %arg5[%c0_9, %c0_10] : memref<1x128xf32, #tpu.memory_space<vmem>>, vector<1x128xf32>
    %12 = vector.broadcast %11 : vector<1x128xf32> to vector<32x128xf32>
    %13 = arith.addf %10, %12 : vector<32x128xf32>
    %14 = arith.negf %13 : vector<32x128xf32>
    %15 = math.exp %14 : vector<32x128xf32>
    %cst_11 = arith.constant 1.000000e+00 : f32
    %16 = vector.broadcast %cst_11 : f32 to vector<32x128xf32>
    %17 = arith.addf %16, %15 : vector<32x128xf32>
    %18 = arith.divf %16, %17 : vector<32x128xf32>
    %c0_12 = arith.constant 0 : index
    %c0_13 = arith.constant 0 : index
    %19 = vector.load %arg6[%c0_12, %c0_13] : memref<32x128xf32, #tpu.memory_space<vmem>>, vector<32x128xf32>
    %20 = arith.mulf %18, %19 : vector<32x128xf32>
    %cst_14 = arith.constant dense<0.000000e+00> : vector<32xf32>
    %21 = vector.multi_reduction <add>, %20, %cst_14 [1] : vector<32x128xf32> to vector<32xf32>
    %22 = vector.shape_cast %21 : vector<32xf32> to vector<32x1xf32>
    %23 = vector.shape_cast %22 : vector<32x1xf32> to vector<32x1xf32>
    %24 = vector.broadcast %23 : vector<32x1xf32> to vector<32x128xf32>
    %c0_15 = arith.constant 0 : index
    %c0_16 = arith.constant 0 : index
    %25 = vector.load %arg7[%c0_15, %c0_16] : memref<32x128xf32, #tpu.memory_space<vmem>>, vector<32x128xf32>
    tpu.vector_store %arg7[%c0_15, %c0_16], %24 {strides = array<i32>} : memref<32x128xf32, #tpu.memory_space<vmem>>, vector<32x128xf32>,
    return
  }
  func.func @transform_0(%arg0: i32) -> (i32, i32) {
    %c0_i32 = arith.constant 0 : i32
    %c0_i32_0 = arith.constant 0 : i32
    return %arg0, %c0_i32 : i32, i32
  }
  func.func @transform_1(%arg0: i32) -> (i32, i32) {
    %c0_i32 = arith.constant 0 : i32
    %c0_i32_0 = arith.constant 0 : i32
    %c0_i32_1 = arith.constant 0 : i32
    return %c0_i32, %c0_i32_0 : i32, i32
  }
  func.func @transform_2(%arg0: i32) -> (i32, i32) {
    %c0_i32 = arith.constant 0 : i32
    %c0_i32_0 = arith.constant 0 : i32
    %c0_i32_1 = arith.constant 0 : i32
    return %c0_i32, %c0_i32_0 : i32, i32
  }
  func.func @transform_3(%arg0: i32) -> (i32, i32) {
    %c0_i32 = arith.constant 0 : i32
    %c0_i32_0 = arith.constant 0 : i32
    %c0_i32_1 = arith.constant 0 : i32
    return %c0_i32, %c0_i32_0 : i32, i32
  }
  func.func @transform_4(%arg0: i32) -> (i32, i32) {
    %c0_i32 = arith.constant 0 : i32
    %c0_i32_0 = arith.constant 0 : i32
    %c0_i32_1 = arith.constant 0 : i32
    return %c0_i32, %c0_i32_0 : i32, i32
  }
  func.func @transform_5(%arg0: i32) -> (i32, i32) {
    %c0_i32 = arith.constant 0 : i32
    %c0_i32_0 = arith.constant 0 : i32
    return %arg0, %c0_i32 : i32, i32
  }
  func.func @transform_6(%arg0: i32) -> (i32, i32) {
    %c0_i32 = arith.constant 0 : i32
    %c0_i32_0 = arith.constant 0 : i32
    return %arg0, %c0_i32 : i32, i32
  }
}

</mosaic_0001>

<llo_original>
// kernel: tpu_custom_call.1
$region0: #{tpu_custom_call.1}
  #allocation0 [shape = 'u32[]', space=smem, size = 0x4, offset = 0x4, fixed_abs, tag = 'smem constant byte address 0x4 - core index']
  #allocation1 [shape = 'u32[144,128]{1,0:T(1,128)}', space=vmem, size = 0x12000, scoped, tag = 'internal scratch']
  %s0 = inlined_call_operand.hbm [shape: bf16[128,128], index: 0, kind: input, shape index: {}]
  %s1 = inlined_call_operand.hbm [shape: bf16[128,128], index: 1, kind: input, shape index: {}]
  %s2 = inlined_call_operand.vmem [shape: f32[1,128], index: 2, kind: input, shape index: {}]
  %s3 = inlined_call_operand.hbm [shape: bf16[128,128], index: 3, kind: input, shape index: {}]
  %s4 = inlined_call_operand.vmem [shape: f32[1,128], index: 4, kind: input, shape index: {}]
  %s5 = inlined_call_operand.hbm [shape: f32[128,128], index: 5, kind: input, shape index: {}]
  %s6 = inlined_call_operand.hbm [shape: f32[128,128], index: 6, kind: output, shape index: {}]
  %s7 = sld [smem:[#allocation0]]
  $region73: #{tpu_custom_call.1} parent=0
    _
  %s9 = ssub.s32 1, %s7
  %s10 = scalar_select 0, %s9, %s7
  $region1: #{tpu_custom_call.1} parent=0
    #allocation2 [shape = 'u8[16384]{0}', space=vmem, size = 0x4000, scoped, tag = 'input window, operand 0']
    #allocation3 [shape = 's32[2]{0}', space=sflag, size = 0x8, scoped, tag = 'scoped memory for tpu_custom_call.1']
    #allocation4 [shape = 's32[2]{0}', space=sflag, size = 0x8, scoped, tag = 'scoped memory for tpu_custom_call.1']
    #allocation5 [shape = 'u8[32768]{0}', space=vmem, size = 0x8000, scoped, tag = 'input window, operand 1, single buffered']
    #allocation6 [shape = 's32[1]{0}', space=sflag, size = 0x4, scoped, tag = 'scoped memory for tpu_custom_call.1']
    #allocation7 [shape = 'u8[32768]{0}', space=vmem, size = 0x8000, scoped, tag = 'input window, operand 3, single buffered']
    #allocation8 [shape = 'u8[32768]{0}', space=vmem, size = 0x8000, scoped, tag = 'input window, operand 5']
    #allocation9 [shape = 's32[2]{0}', space=sflag, size = 0x8, scoped, tag = 'scoped memory for tpu_custom_call.1']
    #allocation10 [shape = 'u8[32768]{0}', space=vmem, size = 0x8000, scoped, tag = 'output window, operand 0']
    %11 = vsyncpa [#allocation3], 0
    %s12 = scalar_lea.sflag [#allocation3], 1
    %13 = vsyncpa %s12, 0
    %14 = vsyncpa [#allocation6], 0
    %15 = vsyncpa [#allocation9], 0
    %s16 = scalar_lea.sflag [#allocation9], 1
    %17 = vsyncpa %s16, 0
    %18 = vsyncpa [#allocation4], 0
    %s19 = scalar_lea.sflag [#allocation4], 1
    %20 = vsyncpa %s19, 0
    loop: start=0, step=1, limit=6
    $region2: #{tpu_custom_call.1} parent=1 // loop_pre_header
      _
    $region3: #{tpu_custom_call.1} parent=1 // loop_header
      %s22 = sphi 0, %s26
      %p23 = scmp.ge.s32.totalorder %s22, 6
      %s32 = sphi 0, %s34
      %s35 = sphi 0, %s32
      %s36 = sphi 0, %s35
      %s52 = sphi 0, %s36
      %s56 = sphi 0, %s56
      %s58 = sphi 0, %s56
      %s59 = sphi 0, %s58
      %s73 = sphi 0, %s59
      %s77 = sphi 0, %s77
      %s79 = sphi 0, %s77
      %s80 = sphi 0, %s79
      %s94 = sphi 0, %s80
      %s98 = sphi 0, %s98
      %s100 = sphi 0, %s98
      %s101 = sphi 0, %s100
      %s115 = sphi 0, %s101
      %s119 = sphi 0, %s119
      %s121 = sphi 0, %s119
      %s122 = sphi 0, %s121
      %s136 = sphi 0, %s122
      %s142 = sphi 0, %s144
      %s145 = sphi 0, %s142
      %s146 = sphi 0, %s145
      %s162 = sphi 0, %s146
      %s168 = sphi 0, %s170
      %s171 = sphi 0, %s168
      %s172 = sphi 0, %s171
      %s188 = sphi 0, %s172
    $region4: #{tpu_custom_call.1} parent=1 // loop_header_branch
      %25 = sbr.rel (%p23) target = $region8
    $region5: #{tpu_custom_call.1} parent=1 // loop_body
      %s27 = ssub.s32 %s22, 1
      %s28 = ssub.s32 %s22, 2
      %s29 = sadd.s32 %s22, 1
      %s30 = ssub.s32 %s22, %s29
      %p31 = scmp.eq.s32.totalorder %s30, 0
      %s33 = sadd.s32 %s32, 1
      %s34 = scalar_select %p31, %s32, %s33
      %p37 = pneg %p31
      %p38 = scmp.eq.s32.totalorder %s22, 3
      %p39 = por %p37, %p38
      %p40 = scmp.ne.s32.totalorder %s32, %s35
      %p41 = scmp.eq.s32.totalorder %s22, 0
      %p42 = por %p40, %p41
      %p43 = scmp.ne.s32.totalorder %s32, %s35
      %p44 = scmp.eq.s32.totalorder %s27, 3
      %p45 = por %p43, %p44
      %p46 = scmp.ne.s32.totalorder %s35, %s36
      %p47 = scmp.eq.s32.totalorder %s27, 0
      %p48 = por %p46, %p47
      %p49 = scmp.ne.s32.totalorder %s35, %s36
      %p50 = scmp.eq.s32.totalorder %s28, 3
      %p51 = por %p49, %p50
      %p53 = scmp.ne.s32.totalorder %s36, %s52
      %p54 = scmp.eq.s32.totalorder %s28, 0
      %p55 = por %p53, %p54
      %s57 = sadd.s32 %s56, 1
      %p60 = scmp.eq.s32.totalorder %s22, 3
      %p61 = scmp.ne.s32.totalorder %s56, %s58
      %p62 = scmp.eq.s32.totalorder %s22, 0
      %p63 = por %p61, %p62
      %p64 = scmp.ne.s32.totalorder %s56, %s58
      %p65 = scmp.eq.s32.totalorder %s27, 3
      %p66 = por %p64, %p65
      %p67 = scmp.ne.s32.totalorder %s58, %s59
      %p68 = scmp.eq.s32.totalorder %s27, 0
      %p69 = por %p67, %p68
      %p70 = scmp.ne.s32.totalorder %s58, %s59
      %p71 = scmp.eq.s32.totalorder %s28, 3
      %p72 = por %p70, %p71
      %p74 = scmp.ne.s32.totalorder %s59, %s73
      %p75 = scmp.eq.s32.totalorder %s28, 0
      %p76 = por %p74, %p75
      %s78 = sadd.s32 %s77, 1
      %p81 = scmp.eq.s32.totalorder %s22, 3
      %p82 = scmp.ne.s32.totalorder %s77, %s79
      %p83 = scmp.eq.s32.totalorder %s22, 0
      %p84 = por %p82, %p83
      %p85 = scmp.ne.s32.totalorder %s77, %s79
      %p86 = scmp.eq.s32.totalorder %s27, 3
      %p87 = por %p85, %p86
      %p88 = scmp.ne.s32.totalorder %s79, %s80
      %p89 = scmp.eq.s32.totalorder %s27, 0
      %p90 = por %p88, %p89
      %p91 = scmp.ne.s32.totalorder %s79, %s80
      %p92 = scmp.eq.s32.totalorder %s28, 3
      %p93 = por %p91, %p92
      %p95 = scmp.ne.s32.totalorder %s80, %s94
      %p96 = scmp.eq.s32.totalorder %s28, 0
      %p97 = por %p95, %p96
      %s99 = sadd.s32 %s98, 1
      %p102 = scmp.eq.s32.totalorder %s22, 3
      %p103 = scmp.ne.s32.totalorder %s98, %s100
      %p104 = scmp.eq.s32.totalorder %s22, 0
      %p105 = por %p103, %p104
      %p106 = scmp.ne.s32.totalorder %s98, %s100
      %p107 = scmp.eq.s32.totalorder %s27, 3
      %p108 = por %p106, %p107
      %p109 = scmp.ne.s32.totalorder %s100, %s101
      %p110 = scmp.eq.s32.totalorder %s27, 0
      %p111 = por %p109, %p110
      %p112 = scmp.ne.s32.totalorder %s100, %s101
      %p113 = scmp.eq.s32.totalorder %s28, 3
      %p114 = por %p112, %p113
      %p116 = scmp.ne.s32.totalorder %s101, %s115
      %p117 = scmp.eq.s32.totalorder %s28, 0
      %p118 = por %p116, %p117
      %s120 = sadd.s32 %s119, 1
      %p123 = scmp.eq.s32.totalorder %s22, 3
      %p124 = scmp.ne.s32.totalorder %s119, %s121
      %p125 = scmp.eq.s32.totalorder %s22, 0
      %p126 = por %p124, %p125
      %p127 = scmp.ne.s32.totalorder %s119, %s121
      %p128 = scmp.eq.s32.totalorder %s27, 3
      %p129 = por %p127, %p128
      %p130 = scmp.ne.s32.totalorder %s121, %s122
      %p131 = scmp.eq.s32.totalorder %s27, 0
      %p132 = por %p130, %p131
      %p133 = scmp.ne.s32.totalorder %s121, %s122
      %p134 = scmp.eq.s32.totalorder %s28, 3
      %p135 = por %p133, %p134
      %p137 = scmp.ne.s32.totalorder %s122, %s136
      %p138 = scmp.eq.s32.totalorder %s28, 0
      %p139 = por %p137, %p138
      %s140 = ssub.s32 %s22, %s29
      %p141 = scmp.eq.s32.totalorder %s140, 0
      %s143 = sadd.s32 %s142, 1
      %s144 = scalar_select %p141, %s142, %s143
      %p147 = pneg %p141
      %p148 = scmp.eq.s32.totalorder %s22, 3
      %p149 = por %p147, %p148
      %p150 = scmp.ne.s32.totalorder %s142, %s145
      %p151 = scmp.eq.s32.totalorder %s22, 0
      %p152 = por %p150, %p151
      %p153 = scmp.ne.s32.totalorder %s142, %s145
      %p154 = scmp.eq.s32.totalorder %s27, 3
      %p155 = por %p153, %p154
      %p156 = scmp.ne.s32.totalorder %s145, %s146
      %p157 = scmp.eq.s32.totalorder %s27, 0
      %p158 = por %p156, %p157
      %p159 = scmp.ne.s32.totalorder %s145, %s146
      %p160 = scmp.eq.s32.totalorder %s28, 3
      %p161 = por %p159, %p160
      %p163 = scmp.ne.s32.totalorder %s146, %s162
      %p164 = scmp.eq.s32.totalorder %s28, 0
      %p165 = por %p163, %p164
      %s166 = ssub.s32 %s22, %s29
      %p167 = scmp.eq.s32.totalorder %s166, 0
      %s169 = sadd.s32 %s168, 1
      %s170 = scalar_select %p167, %s168, %s169
      %p173 = pneg %p167
      %p174 = scmp.eq.s32.totalorder %s22, 3
      %p175 = por %p173, %p174
      %p176 = scmp.ne.s32.totalorder %s168, %s171
      %p177 = scmp.eq.s32.totalorder %s22, 0
      %p178 = por %p176, %p177
      %p179 = scmp.ne.s32.totalorder %s168, %s171
      %p180 = scmp.eq.s32.totalorder %s27, 3
      %p181 = por %p179, %p180
      %p182 = scmp.ne.s32.totalorder %s171, %s172
      %p183 = scmp.eq.s32.totalorder %s27, 0
      %p184 = por %p182, %p183
      %p185 = scmp.ne.s32.totalorder %s171, %s172
      %p186 = scmp.eq.s32.totalorder %s28, 3
      %p187 = por %p185, %p186
      %p189 = scmp.ne.s32.totalorder %s172, %s188
      %p190 = scmp.eq.s32.totalorder %s28, 0
      %p191 = por %p189, %p190
      %p192 = scmp.le.s32.totalorder 1, %s22
      %p193 = scmp.lt.s32.totalorder %s22, 5
      %p194 = pnand %p192, %p193
      %p195 = pneg %p194
      // Predicated region
      $region9: #{tpu_custom_call.1} parent=5 // pred_check
        _
      $region10: #{tpu_custom_call.1} parent=5 // pred_check_branch
        %197 = sbr.rel (%p194) target = $region12
      $region11: #{tpu_custom_call.1} parent=5 // pred_region
        %s198 = ssub.s32 %s22, 1
        // Predicated region
        $region13: #{tpu_custom_call.1} parent=11 // pred_check
          %p199 = pneg %p69
        $region14: #{tpu_custom_call.1} parent=11 // pred_check_branch
          %201 = sbr.rel (%p199) target = $region16
        $region15: #{tpu_custom_call.1} parent=11 // pred_region
          %s203 = ssub.s32 1024, 1024
          %204 = vsyncadd [#allocation6], %s203
          %s205 = sshll.u32 [#allocation5], 4
          %s206 = int_to_ptr.vmem [resolvable:$true] %s205
          %211 = dma.hbm_to_vmem [thread:$0]  %s1, 1024, %s206, [#allocation6], 64, 64, 4
        $region16: #{tpu_custom_call.1} parent=11 // pred_fallthru
          _
        // Predicated region
        $region17: #{tpu_custom_call.1} parent=11 // pred_check
          %p212 = pneg %p90
        $region18: #{tpu_custom_call.1} parent=11 // pred_check_branch
          %214 = sbr.rel (%p212) target = $region20
        $region19: #{tpu_custom_call.1} parent=11 // pred_region
          _
        $region20: #{tpu_custom_call.1} parent=11 // pred_fallthru
          _
        // Predicated region
        $region21: #{tpu_custom_call.1} parent=11 // pred_check
          %p215 = pneg %p111
        $region22: #{tpu_custom_call.1} parent=11 // pred_check_branch
          %217 = sbr.rel (%p215) target = $region24
        $region23: #{tpu_custom_call.1} parent=11 // pred_region
          %s219 = ssub.s32 1024, 1024
          %220 = vsyncadd [#allocation6], %s219
          %s221 = sshll.u32 [#allocation7], 4
          %s222 = int_to_ptr.vmem [resolvable:$true] %s221
          %227 = dma.hbm_to_vmem [thread:$0]  %s3, 1024, %s222, [#allocation6], 64, 64, 4
        $region24: #{tpu_custom_call.1} parent=11 // pred_fallthru
          _
        // Predicated region
        $region25: #{tpu_custom_call.1} parent=11 // pred_check
          %p228 = pneg %p132
        $region26: #{tpu_custom_call.1} parent=11 // pred_check_branch
          %230 = sbr.rel (%p228) target = $region28
        $region27: #{tpu_custom_call.1} parent=11 // pred_region
          _
        $region28: #{tpu_custom_call.1} parent=11 // pred_fallthru
          _
      $region12: #{tpu_custom_call.1} parent=5 // pred_fallthru
        _
      %p231 = scmp.lt.s32.totalorder %s22, 4
      // Predicated region
      $region29: #{tpu_custom_call.1} parent=5 // pred_check
        %p232 = pneg %p231
      $region30: #{tpu_custom_call.1} parent=5 // pred_check_branch
        %234 = sbr.rel (%p232) target = $region32
      $region31: #{tpu_custom_call.1} parent=5 // pred_region
        // Predicated region
        $region33: #{tpu_custom_call.1} parent=31 // pred_check
          %p235 = pneg %p42
        $region34: #{tpu_custom_call.1} parent=31 // pred_check_branch
          %237 = sbr.rel (%p235) target = $region36
        $region35: #{tpu_custom_call.1} parent=31 // pred_region
          %s238 = sand.u32 %s32, 1
          %s239 = scalar_lea.sflag [#allocation3], %s238
          %s240 = sand.u32 %s32, 1
          %s241 = smul.addr %s240, 16
          %s242 = scalar_lea.vmem [#allocation2], %s241
          %s243 = smul.u32 4, %s22
          %s245 = ssub.s32 256, 256
          %246 = vsyncadd %s239, %s245
          %s247 = smul.addr %s243, 64
          %s248 = scalar_lea.hbm %s0, %s247
          %s249 = sshll.u32 %s242, 4
          %s250 = int_to_ptr.vmem [resolvable:$true] %s249
          %255 = dma.hbm_to_vmem [thread:$0]  %s248, 256, %s250, %s239, 64, 64, 4
        $region36: #{tpu_custom_call.1} parent=31 // pred_fallthru
          _
        // Predicated region
        $region37: #{tpu_custom_call.1} parent=31 // pred_check
          %p256 = pneg %p152
        $region38: #{tpu_custom_call.1} parent=31 // pred_check_branch
          %258 = sbr.rel (%p256) target = $region40
        $region39: #{tpu_custom_call.1} parent=31 // pred_region
          %s259 = sand.u32 %s142, 1
          %s260 = scalar_lea.sflag [#allocation9], %s259
          %s261 = sand.u32 %s142, 1
          %s262 = smul.addr %s261, 32
          %s263 = scalar_lea.vmem [#allocation8], %s262
          %s264 = smul.u32 4, %s22
          %s266 = ssub.s32 512, 512
          %267 = vsyncadd %s260, %s266
          %s268 = smul.addr %s264, 128
          %s269 = scalar_lea.hbm %s5, %s268
          %s270 = sshll.u32 %s263, 4
          %s271 = int_to_ptr.vmem [resolvable:$true] %s270
          %276 = dma.hbm_to_vmem [thread:$0]  %s269, 512, %s271, %s260, 128, 128, 8
        $region40: #{tpu_custom_call.1} parent=31 // pred_fallthru
          _
      $region32: #{tpu_custom_call.1} parent=5 // pred_fallthru
        _
      %p277 = scmp.le.s32.totalorder 1, %s22
      %p278 = scmp.lt.s32.totalorder %s22, 5
      %p279 = pnand %p277, %p278
      %p280 = pneg %p279
      // Predicated region
      $region41: #{tpu_custom_call.1} parent=5 // pred_check
        _
      $region42: #{tpu_custom_call.1} parent=5 // pred_check_branch
        %282 = sbr.rel (%p279) target = $region44
      $region43: #{tpu_custom_call.1} parent=5 // pred_region
        %s283 = ssub.s32 %s22, 1
        %s284 = sand.u32 %s35, 1
        %s285 = scalar_lea.sflag [#allocation3], %s284
        %s286 = sand.u32 %s35, 1
        %s287 = smul.addr %s286, 16
        %s288 = scalar_lea.vmem [#allocation2], %s287
        // Predicated region
        $region45: #{tpu_custom_call.1} parent=43 // pred_check
          %p289 = pneg %p48
        $region46: #{tpu_custom_call.1} parent=43 // pred_check_branch
          %291 = sbr.rel (%p289) target = $region48
        $region47: #{tpu_custom_call.1} parent=43 // pred_region
          %292 = dma.done %s285, 256
        $region48: #{tpu_custom_call.1} parent=43 // pred_fallthru
          _
        // Predicated region
        $region49: #{tpu_custom_call.1} parent=43 // pred_check
          %p293 = pneg %p69
        $region50: #{tpu_custom_call.1} parent=43 // pred_check_branch
          %295 = sbr.rel (%p293) target = $region52
        $region51: #{tpu_custom_call.1} parent=43 // pred_region
          %296 = dma.done [#allocation6], 1024
        $region52: #{tpu_custom_call.1} parent=43 // pred_fallthru
          _
        // Predicated region
        $region53: #{tpu_custom_call.1} parent=43 // pred_check
          %p297 = pneg %p111
        $region54: #{tpu_custom_call.1} parent=43 // pred_check_branch
          %299 = sbr.rel (%p297) target = $region56
        $region55: #{tpu_custom_call.1} parent=43 // pred_region
          %300 = dma.done [#allocation6], 1024
        $region56: #{tpu_custom_call.1} parent=43 // pred_fallthru
          _
        %s301 = sand.u32 %s145, 1
        %s302 = scalar_lea.sflag [#allocation9], %s301
        %s303 = sand.u32 %s145, 1
        %s304 = smul.addr %s303, 32
        %s305 = scalar_lea.vmem [#allocation8], %s304
        // Predicated region
        $region57: #{tpu_custom_call.1} parent=43 // pred_check
          %p306 = pneg %p158
        $region58: #{tpu_custom_call.1} parent=43 // pred_check_branch
          %308 = sbr.rel (%p306) target = $region60
        $region59: #{tpu_custom_call.1} parent=43 // pred_region
          %309 = dma.done %s302, 512
        $region60: #{tpu_custom_call.1} parent=43 // pred_fallthru
          _
        %s310 = sand.u32 %s35, 1
        %s311 = scalar_lea.sflag [#allocation3], %s310
        %s312 = sand.u32 %s35, 1
        %s313 = smul.addr %s312, 16
        %s314 = scalar_lea.vmem [#allocation2], %s313
        %p315 = pneg %p48
        %p316 = pneg %p45
        %p317 = pneg %p69
        %p318 = pneg %p66
        %p319 = pneg %p90
        %p320 = pneg %p87
        %p321 = pneg %p111
        %p322 = pneg %p108
        %p323 = pneg %p132
        %p324 = pneg %p129
        %s325 = sand.u32 %s145, 1
        %s326 = scalar_lea.sflag [#allocation9], %s325
        %s327 = sand.u32 %s145, 1
        %s328 = smul.addr %s327, 32
        %s329 = scalar_lea.vmem [#allocation8], %s328
        %p330 = pneg %p158
        %p331 = pneg %p155
        %p332 = pneg %p184
        %p333 = pneg %p181
        %s334 = sand.u32 %s171, 1
        %s335 = scalar_lea.sflag [#allocation4], %s334
        %s336 = sand.u32 %s171, 1
        %s337 = smul.addr %s336, 32
        %s338 = scalar_lea.vmem [#allocation10], %s337
        %s339 = smul.u32 4, %s27
        %s340 = smul.u32 4, %s27
        %s341 = smul.u32 4, %s27
        %v343 = vld [vmem:[%s288] sm:$0xf]
        %v344 = vld [vmem:[%s288 + $0x4] sm:$0xf]
        %v345 = vld [vmem:[%s288 + $0x8] sm:$0xf]
        %v346 = vld [vmem:[%s288 + $0xc] sm:$0xf]
        %v347 = vld [vmem:[#allocation5] sm:$0xf]
        %v348 = vld [vmem:[#allocation5 + $0x4] sm:$0xf]
        %v349 = vld [vmem:[#allocation5 + $0x8] sm:$0xf]
        %v350 = vld [vmem:[#allocation5 + $0xc] sm:$0xf]
        %v351 = vld [vmem:[#allocation5 + $0x10] sm:$0xf]
        %v352 = vld [vmem:[#allocation5 + $0x14] sm:$0xf]
        %v353 = vld [vmem:[#allocation5 + $0x18] sm:$0xf]
        %v354 = vld [vmem:[#allocation5 + $0x1c] sm:$0xf]
        %v355 = vld [vmem:[#allocation5 + $0x20] sm:$0xf]
        %v356 = vld [vmem:[#allocation5 + $0x24] sm:$0xf]
        %v357 = vld [vmem:[#allocation5 + $0x28] sm:$0xf]
        %v358 = vld [vmem:[#allocation5 + $0x2c] sm:$0xf]
        %v359 = vld [vmem:[#allocation5 + $0x30] sm:$0xf]
        %v360 = vld [vmem:[#allocation5 + $0x34] sm:$0xf]
        %v361 = vld [vmem:[#allocation5 + $0x38] sm:$0xf]
        %v362 = vld [vmem:[#allocation5 + $0x3c] sm:$0xf]
        %v363 = vld [vmem:[%s2] sm:$0x1]
        %v365 = vlaneseq
        %v366 = vshrl.u32 %v365, 7
        %v367 = vsub.s32 0, %v366
        %v368 = vrot.slane %v363, %v367
        %v374 = vunpack.c.l.b16 %v343
        %v375 = vunpack.c.l.b16 %v344
        %v376 = vunpack.c.l.b16 %v345
        %v377 = vunpack.c.l.b16 %v346
        %v378 = vpack.c.b16 %v375, %v374
        %v379 = vpack.c.b16 %v377, %v376
        %v398 = vunpack.c.l.b16 %v347
        %v399 = vunpack.c.l.b16 %v348
        %v400 = vunpack.c.l.b16 %v349
        %v401 = vunpack.c.l.b16 %v350
        %v402 = vunpack.c.l.b16 %v351
        %v403 = vunpack.c.l.b16 %v352
        %v404 = vunpack.c.l.b16 %v353
        %v405 = vunpack.c.l.b16 %v354
        %v406 = vunpack.c.l.b16 %v355
        %v407 = vunpack.c.l.b16 %v356
        %v408 = vunpack.c.l.b16 %v357
        %v409 = vunpack.c.l.b16 %v358
        %v410 = vunpack.c.l.b16 %v359
        %v411 = vunpack.c.l.b16 %v360
        %v412 = vunpack.c.l.b16 %v361
        %v413 = vunpack.c.l.b16 %v362
        %v414 = vpack.c.b16 %v399, %v398
        %v415 = vpack.c.b16 %v401, %v400
        %v416 = vpack.c.b16 %v403, %v402
        %v417 = vpack.c.b16 %v405, %v404
        %v418 = vpack.c.b16 %v407, %v406
        %v419 = vpack.c.b16 %v409, %v408
        %v420 = vpack.c.b16 %v411, %v410
        %v421 = vpack.c.b16 %v413, %v412
        %430 = vmatprep.subr.bf16.mxu0 0
        %431 = vmatpush1.bf16.msra.mxu0 %v414
        %432 = vmatprep.subr.bf16.mxu0 0
        %433 = vmatpush1.bf16.msra.mxu0 %v415
        %434 = vmatprep.subr.bf16.mxu0 0
        %435 = vmatpush1.bf16.msra.mxu0 %v416
        %436 = vmatprep.subr.bf16.mxu0 0
        %437 = vmatpush1.bf16.msra.mxu0 %v417
        %438 = vmatprep.subr.bf16.mxu0 0
        %439 = vmatpush1.bf16.msra.mxu0 %v418
        %440 = vmatprep.subr.bf16.mxu0 0
        %441 = vmatpush1.bf16.msra.mxu0 %v419
        %442 = vmatprep.subr.bf16.mxu0 0
        %443 = vmatpush1.bf16.msra.mxu0 %v420
        %444 = vmatprep.subr.bf16.mxu0 0
        %445 = vmatpush1.bf16.msra.mxu0 %v421
        %446 = vmatprep.subr.bf16.mxu0 0
        %447 = vmatpush1.bf16.msra.mxu0 0
        %448 = vmatprep.subr.bf16.mxu0 0
        %449 = vmatpush1.bf16.msra.mxu0 0
        %450 = vmatprep.subr.bf16.mxu0 0
        %451 = vmatpush1.bf16.msra.mxu0 0
        %452 = vmatprep.subr.bf16.mxu0 0
        %453 = vmatpush1.bf16.msra.mxu0 0
        %454 = vmatprep.subr.bf16.mxu0 0
        %455 = vmatpush1.bf16.msra.mxu0 0
        %456 = vmatprep.subr.bf16.mxu0 0
        %457 = vmatpush1.bf16.msra.mxu0 0
        %458 = vmatprep.subr.bf16.mxu0 0
        %459 = vmatpush1.bf16.msra.mxu0 0
        %460 = vmatprep.subr.bf16.mxu0 0
        %461 = vmatpush1.bf16.msra.mxu0 0
        %462 = vmatprep.mubr.bf16.mxu0 0
        %463 = vmatmul.mubr.bf16.gmra.mrb[0].mxu0 %v378
        %v464 = vpop.f32.mrb[0].mxu0
        %v465 = vadd.f32 %v368, %v464
        %v466 = vpop.f32.mrb[0].mxu0
        %v467 = vpop.f32.mrb[0].mxu0
        %v468 = vadd.f32 %v368, %v467
        %v469 = vpop.f32.mrb[0].mxu0
        %470 = vmatprep.mubr.bf16.mxu0 0
        %471 = vmatmul.mubr.bf16.gmra.mrb[0].mxu0 %v379
        %v472 = vpop.f32.mrb[0].mxu0
        %v473 = vadd.f32 %v368, %v472
        %v474 = vpop.f32.mrb[0].mxu0
        %v475 = vpop.f32.mrb[0].mxu0
        %v476 = vadd.f32 %v368, %v475
        %v477 = vpop.f32.mrb[0].mxu0
        %478 = vdwg.mxu0
        %v479 = vmax.f32 %v465, 0.0
        %v480 = vmax.f32 %v468, 0.0
        %v481 = vmax.f32 %v473, 0.0
        %v482 = vmax.f32 %v476, 0.0
        %v483 = vpack.c.bf16 %v480, %v479
        %v484 = vpack.c.bf16 %v482, %v481
        %v485 = vld [vmem:[#allocation7] sm:$0xf]
        %v486 = vld [vmem:[#allocation7 + $0x4] sm:$0xf]
        %v487 = vld [vmem:[#allocation7 + $0x8] sm:$0xf]
        %v488 = vld [vmem:[#allocation7 + $0xc] sm:$0xf]
        %v489 = vld [vmem:[#allocation7 + $0x10] sm:$0xf]
        %v490 = vld [vmem:[#allocation7 + $0x14] sm:$0xf]
        %v491 = vld [vmem:[#allocation7 + $0x18] sm:$0xf]
        %v492 = vld [vmem:[#allocation7 + $0x1c] sm:$0xf]
        %v493 = vld [vmem:[#allocation7 + $0x20] sm:$0xf]
        %v494 = vld [vmem:[#allocation7 + $0x24] sm:$0xf]
        %v495 = vld [vmem:[#allocation7 + $0x28] sm:$0xf]
        %v496 = vld [vmem:[#allocation7 + $0x2c] sm:$0xf]
        %v497 = vld [vmem:[#allocation7 + $0x30] sm:$0xf]
        %v498 = vld [vmem:[#allocation7 + $0x34] sm:$0xf]
        %v499 = vld [vmem:[#allocation7 + $0x38] sm:$0xf]
        %v500 = vld [vmem:[#allocation7 + $0x3c] sm:$0xf]
        %v501 = vld [vmem:[%s4] sm:$0x1]
        %v503 = vlaneseq
        %v504 = vshrl.u32 %v503, 7
        %v505 = vsub.s32 0, %v504
        %v506 = vrot.slane %v501, %v505
        %v524 = vunpack.c.l.b16 %v485
        %v525 = vunpack.c.l.b16 %v486
        %v526 = vunpack.c.l.b16 %v487
        %v527 = vunpack.c.l.b16 %v488
        %v528 = vunpack.c.l.b16 %v489
        %v529 = vunpack.c.l.b16 %v490
        %v530 = vunpack.c.l.b16 %v491
        %v531 = vunpack.c.l.b16 %v492
        %v532 = vunpack.c.l.b16 %v493
        %v533 = vunpack.c.l.b16 %v494
        %v534 = vunpack.c.l.b16 %v495
        %v535 = vunpack.c.l.b16 %v496
        %v536 = vunpack.c.l.b16 %v497
        %v537 = vunpack.c.l.b16 %v498
        %v538 = vunpack.c.l.b16 %v499
        %v539 = vunpack.c.l.b16 %v500
        %v540 = vpack.c.b16 %v525, %v524
        %v541 = vpack.c.b16 %v527, %v526
        %v542 = vpack.c.b16 %v529, %v528
        %v543 = vpack.c.b16 %v531, %v530
        %v544 = vpack.c.b16 %v533, %v532
        %v545 = vpack.c.b16 %v535, %v534
        %v546 = vpack.c.b16 %v537, %v536
        %v547 = vpack.c.b16 %v539, %v538
        %556 = vmatprep.subr.bf16.mxu0 0
        %557 = vmatpush1.bf16.msra.mxu0 %v540
        %558 = vmatprep.subr.bf16.mxu0 0
        %559 = vmatpush1.bf16.msra.mxu0 %v541
        %560 = vmatprep.subr.bf16.mxu0 0
        %561 = vmatpush1.bf16.msra.mxu0 %v542
        %562 = vmatprep.subr.bf16.mxu0 0
        %563 = vmatpush1.bf16.msra.mxu0 %v543
        %564 = vmatprep.subr.bf16.mxu0 0
        %565 = vmatpush1.bf16.msra.mxu0 %v544
        %566 = vmatprep.subr.bf16.mxu0 0
        %567 = vmatpush1.bf16.msra.mxu0 %v545
        %568 = vmatprep.subr.bf16.mxu0 0
        %569 = vmatpush1.bf16.msra.mxu0 %v546
        %570 = vmatprep.subr.bf16.mxu0 0
        %571 = vmatpush1.bf16.msra.mxu0 %v547
        %572 = vmatprep.subr.bf16.mxu0 0
        %573 = vmatpush1.bf16.msra.mxu0 0
        %574 = vmatprep.subr.bf16.mxu0 0
        %575 = vmatpush1.bf16.msra.mxu0 0
        %576 = vmatprep.subr.bf16.mxu0 0
        %577 = vmatpush1.bf16.msra.mxu0 0
        %578 = vmatprep.subr.bf16.mxu0 0
        %579 = vmatpush1.bf16.msra.mxu0 0
        %580 = vmatprep.subr.bf16.mxu0 0
        %581 = vmatpush1.bf16.msra.mxu0 0
        %582 = vmatprep.subr.bf16.mxu0 0
        %583 = vmatpush1.bf16.msra.mxu0 0
        %584 = vmatprep.subr.bf16.mxu0 0
        %585 = vmatpush1.bf16.msra.mxu0 0
        %586 = vmatprep.subr.bf16.mxu0 0
        %587 = vmatpush1.bf16.msra.mxu0 0
        %588 = vmatprep.mubr.bf16.mxu0 0
        %589 = vmatmul.mubr.bf16.gmra.mrb[0].mxu0 %v483
        %v590 = vpop.f32.mrb[0].mxu0
        %v591 = vadd.f32 %v506, %v590
        %v592 = vpop.f32.mrb[0].mxu0
        %v593 = vpop.f32.mrb[0].mxu0
        %v594 = vadd.f32 %v506, %v593
        %v595 = vpop.f32.mrb[0].mxu0
        %596 = vmatprep.mubr.bf16.mxu0 0
        %597 = vmatmul.mubr.bf16.gmra.mrb[0].mxu0 %v484
        %v598 = vpop.f32.mrb[0].mxu0
        %v599 = vadd.f32 %v506, %v598
        %v600 = vpop.f32.mrb[0].mxu0
        %v601 = vpop.f32.mrb[0].mxu0
        %v602 = vadd.f32 %v506, %v601
        %v603 = vpop.f32.mrb[0].mxu0
        %604 = vdwg.mxu0
        %v605 = vxor.u32 %v591, 2147483648
        %v606 = vxor.u32 %v594, 2147483648
        %v607 = vxor.u32 %v599, 2147483648
        %v608 = vxor.u32 %v602, 2147483648
        %v609 = vmul.f32 %v605, 1.442695
        %v610 = vpow.pop %v609
        %v611 = vmul.f32 %v606, 1.442695
        %v612 = vpow.pop %v611
        %v613 = vmul.f32 %v607, 1.442695
        %v614 = vpow.pop %v613
        %v615 = vmul.f32 %v608, 1.442695
        %v616 = vpow.pop %v615
        %v617 = vadd.f32 %v610, 1.0
        %v618 = vadd.f32 %v612, 1.0
        %v619 = vadd.f32 %v614, 1.0
        %v620 = vadd.f32 %v616, 1.0
        %v621 = vrcp.pop %v617
        %v622 = vmul.f32 1.0, %v621
        %v623 = vrcp.pop %v618
        %v624 = vmul.f32 1.0, %v623
        %v625 = vrcp.pop %v619
        %v626 = vmul.f32 1.0, %v625
        %v627 = vrcp.pop %v620
        %v628 = vmul.f32 1.0, %v627
        %v629 = vld [vmem:[%s305] sm:$0xff]
        %v630 = vld [vmem:[%s305 + $0x8] sm:$0xff]
        %v631 = vld [vmem:[%s305 + $0x10] sm:$0xff]
        %v632 = vld [vmem:[%s305 + $0x18] sm:$0xff]
        %v633 = vmul.f32 %v622, %v629
        %v634 = vmul.f32 %v624, %v630
        %v635 = vmul.f32 %v626, %v631
        %v636 = vmul.f32 %v628, %v632
        %637 = vadd.xlane.f32.xlu0 %v633
        %v638 = vpop.xlane.xlu0 %637
        %639 = vadd.xlane.f32.xlu0 %v634
        %v640 = vpop.xlane.xlu0 %639
        %641 = vadd.xlane.f32.xlu0 %v635
        %v642 = vpop.xlane.xlu0 %641
        %643 = vadd.xlane.f32.xlu0 %v636
        %v644 = vpop.xlane.xlu0 %643
        %645 = vst [vmem:[%s338] sm:$0xff] %v638
        %646 = vst [vmem:[%s338 + $0x8] sm:$0xff] %v640
        %647 = vst [vmem:[%s338 + $0x10] sm:$0xff] %v642
        %648 = vst [vmem:[%s338 + $0x18] sm:$0xff] %v644
        %s649 = sand.u32 %s171, 1
        %s650 = scalar_lea.sflag [#allocation4], %s649
        %s651 = sand.u32 %s171, 1
        %s652 = smul.addr %s651, 32
        %s653 = scalar_lea.vmem [#allocation10], %s652
        // Predicated region
        $region61: #{tpu_custom_call.1} parent=43 // pred_check
          %p654 = pneg %p181
        $region62: #{tpu_custom_call.1} parent=43 // pred_check_branch
          %656 = sbr.rel (%p654) target = $region64
        $region63: #{tpu_custom_call.1} parent=43 // pred_region
          %s657 = smul.u32 4, %s27
          %s659 = ssub.s32 512, 512
          %660 = vsyncadd %s650, %s659
          %s661 = smul.addr %s657, 128
          %s662 = scalar_lea.hbm %s6, %s661
          %s663 = sshll.u32 %s653, 4
          %s664 = int_to_ptr.vmem [resolvable:$true] %s663
          %669 = dma.vmem_to_hbm [thread:$0]  %s664, 512, %s662, %s650, 128, 128, 8
        $region64: #{tpu_custom_call.1} parent=43 // pred_fallthru
          _
      $region44: #{tpu_custom_call.1} parent=5 // pred_fallthru
        _
      %p670 = scmp.le.s32.totalorder 2, %s22
      // Predicated region
      $region65: #{tpu_custom_call.1} parent=5 // pred_check
        %p671 = pneg %p670
      $region66: #{tpu_custom_call.1} parent=5 // pred_check_branch
        %673 = sbr.rel (%p671) target = $region68
      $region67: #{tpu_custom_call.1} parent=5 // pred_region
        %s674 = ssub.s32 %s22, 2
        // Predicated region
        $region69: #{tpu_custom_call.1} parent=67 // pred_check
          %p675 = pneg %p187
        $region70: #{tpu_custom_call.1} parent=67 // pred_check_branch
          %677 = sbr.rel (%p675) target = $region72
        $region71: #{tpu_custom_call.1} parent=67 // pred_region
          %s678 = sand.u32 %s172, 1
          %s679 = scalar_lea.sflag [#allocation4], %s678
          %s680 = sand.u32 %s172, 1
          %s681 = smul.addr %s680, 32
          %s682 = scalar_lea.vmem [#allocation10], %s681
          %683 = dma.done %s679, 512
        $region72: #{tpu_custom_call.1} parent=67 // pred_fallthru
          _
      $region68: #{tpu_custom_call.1} parent=5 // pred_fallthru
        _
    $region6: #{tpu_custom_call.1} parent=1 // loop_footer
      %s26 = sadd.s32 1, %s22
    $region7: #{tpu_custom_call.1} parent=1 // loop_footer_branch
      %21 = sbr.rel target = $region3
    $region8: #{tpu_custom_call.1} parent=1 // loop_exit
      _
    %684 = vsyncpa [#allocation3], 1
    %s685 = scalar_lea.sflag [#allocation3], 1
    %686 = vsyncpa %s685, 1
    %687 = vsyncpa [#allocation6], 1
    %688 = vsyncpa [#allocation9], 1
    %s689 = scalar_lea.sflag [#allocation9], 1
    %690 = vsyncpa %s689, 1
    %691 = vsyncpa [#allocation4], 1
    %s692 = scalar_lea.sflag [#allocation4], 1
    %693 = vsyncpa %s692, 1

</llo_original>
